<compile_context>
chip_gen: v5e
topology: v5e:2x2
jax: 0.10.0
libtpu: 0.0.40
codegen_flags: <defaults>
</compile_context>

<pallas_src>
import jax
import jax.numpy as jnp
from jax.experimental import pallas as pl
from jax.experimental.pallas import tpu as pltpu


def _round_up(x: int, m: int) -> int:
    return ((x + m - 1) // m) * m


def _make_kernel(n_valid: int, tm: int, tn: int):
    def kernel(s_ref, p_ref, c_ref, out_ref):
        i = pl.program_id(0)
        s = s_ref[...]                                          # (tm, 1)  s[i] per row
        p = p_ref[...]                                          # (1, tn)  p[k]
        c = c_ref[...]                                          # (1, tn)  c[k] (in-degree)

        # Mask rows past the true N (padded rows must not contribute).
        row_ids = jax.lax.broadcasted_iota(jnp.int32, (tm, 1), 0) + i * tm
        mask = (row_ids < n_valid).astype(jnp.float32)          # (tm, 1)

        # |cont| / 0.05 for this (row, lane) tile; padded lanes have p = c = 0.
        err = jnp.abs(p - s * c)                                # (tm, tn)
        colsum = jnp.sum(mask * err, axis=0, keepdims=True)     # (1, tn) lane-dense

        out_ref[...] = colsum.reshape(1, 1, 1, tn)

    return kernel


def cont_res_loss(V, edges):
    """V: (N, 2) float node features, edges: (2, E) int edge index -> scalar loss."""
    N = int(V.shape[0])
    f32 = jnp.float32

    # s[i] = u[i] + v[i]
    s = (V[:, 0] + V[:, 1]).astype(f32)                         # (N,)

    # Edge-list segment sums replace the dense adjacency (A[j,k] = #edges j->k):
    #   c[k] = sum_j A[j,k]  (in-degree of k),  p[k] = sum_j s[j] * A[j,k]
    # TODO(synk): data-dependent scatter-add (to_dense_adj equivalent) stays in plain JAX.
    src = edges[0].astype(jnp.int32)
    dst = edges[1].astype(jnp.int32)
    c = jnp.zeros((N,), f32).at[dst].add(1.0)
    p = jnp.zeros((N,), f32).at[dst].add(s[src])

    # Tile sizes: lane dim a multiple of 128, sublane dim a multiple of 8.
    tm = 256 if N >= 256 else _round_up(N, 8)
    tn = min(_round_up(N, 128), 2048)
    rows_pad = _round_up(N, tm)
    lanes_pad = _round_up(N, tn)
    grid = (rows_pad // tm, lanes_pad // tn)

    # Padded, layout-friendly operands (padded columns have p = c = 0 => err = 0 there).
    s_col = jnp.zeros((rows_pad, 1), f32).at[:N, 0].set(s)
    p_row = jnp.zeros((1, lanes_pad), f32).at[0, :N].set(p)
    c_row = jnp.zeros((1, lanes_pad), f32).at[0, :N].set(c)

    kernel = _make_kernel(N, tm, tn)

    cost = pl.CostEstimate(
        flops=5 * N * N,
        transcendentals=0,
        bytes_accessed=(rows_pad + 2 * lanes_pad + grid[0] * lanes_pad) * 4,
    )

    partials = pl.pallas_call(
        kernel,
        out_shape=jax.ShapeDtypeStruct((grid[0], grid[1], 1, tn), f32),
        grid=grid,
        in_specs=[
            pl.BlockSpec((tm, 1), lambda i, j: (i, 0)),          # s (per row tile)
            pl.BlockSpec((1, tn), lambda i, j: (0, j)),          # p (per lane tile)
            pl.BlockSpec((1, tn), lambda i, j: (0, j)),          # c (per lane tile)
        ],
        out_specs=pl.BlockSpec((1, 1, 1, tn), lambda i, j: (i, j, 0, 0)),
        compiler_params=pltpu.CompilerParams(
            dimension_semantics=("parallel", "parallel"),
            vmem_limit_bytes=32 * 1024 * 1024,
        ),
        cost_estimate=cost,
    )(s_col, p_row, c_row)

    # mean(|0.05 * err|) over the original N x N matrix; final torch.abs kept for fidelity.
    return jnp.abs(jnp.sum(partials) * (0.05 / float(N * N)))


if __name__ == "__main__":
    N, E = 16, 40                                   # 16 nodes, 40 directed edges
    key = jax.random.PRNGKey(0)
    kv, ke = jax.random.split(key)

    V = jax.random.normal(kv, (N, 2), dtype=jnp.float32)
    edges = jax.random.randint(ke, (2, E), 0, N, dtype=jnp.int32)

    out = cont_res_loss(V, edges)
    jax.block_until_ready(out)

    # Pure-JAX reference mirroring the PyTorch forward literally.
    u = V[:, 0]
    v = V[:, 1]
    U = jnp.tile(u[None, :], (N, 1))                # u.repeat(N, 1)
    Vm = jnp.tile(v[None, :], (N, 1))
    u_diff = U - U.T
    v_diff = Vm - Vm.T
    A = jnp.zeros((N, N), jnp.float32).at[edges[0], edges[1]].add(1.0)
    adj = 0.05 * A
    cont = u_diff @ adj + v_diff @ adj
    ref = jnp.abs(jnp.abs(cont).mean())

    assert jnp.allclose(out, ref, atol=1e-5, rtol=1e-5), (out, ref)

    print("KERNEL_OK")
</pallas_src>

<mosaic_0001>
module attributes {stable_mosaic.version = 11 : i64} {
  func.func @kernel(%arg0: i32, %arg1: i32, %arg2: memref<16x1xf32, #tpu.memory_space<vmem>>, %arg3: memref<1x128xf32, #tpu.memory_space<vmem>>, %arg4: memref<1x128xf32, #tpu.memory_space<vmem>>, %arg5: memref<1x1x1x128xf32, #tpu.memory_space<vmem>>) attributes {dimension_semantics = [#tpu.dimension_semantics<parallel>, #tpu.dimension_semantics<parallel>], iteration_bounds = array<i64: 1, 1>, scalar_prefetch = 0 : i64, scratch_operands = 0 : i64, tpu.core_type = #tpu.core_type<tc>, window_params = [{transform_indices = @transform_0, window_bounds = array<i64: 16, 1>}, {transform_indices = @transform_1, window_bounds = array<i64: 1, 128>}, {transform_indices = @transform_2, window_bounds = array<i64: 1, 128>}, {transform_indices = @transform_3, window_bounds = array<i64: 1, 1, 1, 128>}]} {
    %c0 = arith.constant 0 : index
    %c0_0 = arith.constant 0 : index
    %0 = vector.load %arg2[%c0, %c0_0] : memref<16x1xf32, #tpu.memory_space<vmem>>, vector<16x1xf32>
    %c0_1 = arith.constant 0 : index
    %c0_2 = arith.constant 0 : index
    %1 = vector.load %arg3[%c0_1, %c0_2] : memref<1x128xf32, #tpu.memory_space<vmem>>, vector<1x128xf32>
    %c0_3 = arith.constant 0 : index
    %c0_4 = arith.constant 0 : index
    %2 = vector.load %arg4[%c0_3, %c0_4] : memref<1x128xf32, #tpu.memory_space<vmem>>, vector<1x128xf32>
    %3 = tpu.iota {dimensions = array<i32: 0>} : vector<16x1xi32>
    %c16_i32 = arith.constant 16 : i32
    %4 = arith.muli %arg0, %c16_i32 : i32
    %5 = vector.broadcast %4 : i32 to vector<16x1xi32>
    %6 = arith.addi %3, %5 : vector<16x1xi32>
    %c16_i32_5 = arith.constant 16 : i32
    %7 = vector.broadcast %c16_i32_5 : i32 to vector<16x1xi32>
    %8 = arith.cmpi slt, %6, %7 : vector<16x1xi32>
    %9 = arith.extui %8 : vector<16x1xi1> to vector<16x1xi32>
    %10 = arith.sitofp %9 : vector<16x1xi32> to vector<16x1xf32>
    %11 = vector.broadcast %0 : vector<16x1xf32> to vector<16x128xf32>
    %12 = vector.broadcast %2 : vector<1x128xf32> to vector<16x128xf32>
    %13 = arith.mulf %11, %12 : vector<16x128xf32>
    %14 = vector.broadcast %1 : vector<1x128xf32> to vector<16x128xf32>
    %15 = arith.subf %14, %13 : vector<16x128xf32>
    %16 = math.absf %15 : vector<16x128xf32>
    %17 = vector.broadcast %10 : vector<16x1xf32> to vector<16x128xf32>
    %18 = arith.mulf %17, %16 : vector<16x128xf32>
    %cst = arith.constant dense<0.000000e+00> : vector<128xf32>
    %19 = vector.multi_reduction <add>, %18, %cst [0] : vector<16x128xf32> to vector<128xf32>
    %20 = vector.shape_cast %19 : vector<128xf32> to vector<1x128xf32>
    %21 = vector.shape_cast %20 : vector<1x128xf32> to vector<1x1x1x128xf32>
    %c0_6 = arith.constant 0 : index
    %c0_7 = arith.constant 0 : index
    %c0_8 = arith.constant 0 : index
    %c0_9 = arith.constant 0 : index
    %22 = vector.load %arg5[%c0_6, %c0_7, %c0_8, %c0_9] : memref<1x1x1x128xf32, #tpu.memory_space<vmem>>, vector<1x1x1x128xf32>
    tpu.vector_store %arg5[%c0_6, %c0_7, %c0_8, %c0_9], %21 {strides = array<i32>} : memref<1x1x1x128xf32, #tpu.memory_space<vmem>>, vector<1x1x1x128xf32>,
    return
  }
  func.func @transform_0(%arg0: i32, %arg1: i32) -> (i32, i32) {
    %c0_i32 = arith.constant 0 : i32
    %c0_i32_0 = arith.constant 0 : i32
    return %arg0, %c0_i32 : i32, i32
  }
  func.func @transform_1(%arg0: i32, %arg1: i32) -> (i32, i32) {
    %c0_i32 = arith.constant 0 : i32
    %c0_i32_0 = arith.constant 0 : i32
    return %c0_i32, %arg1 : i32, i32
  }
  func.func @transform_2(%arg0: i32, %arg1: i32) -> (i32, i32) {
    %c0_i32 = arith.constant 0 : i32
    %c0_i32_0 = arith.constant 0 : i32
    return %c0_i32, %arg1 : i32, i32
  }
  func.func @transform_3(%arg0: i32, %arg1: i32) -> (i32, i32, i32, i32) {
    %c0_i32 = arith.constant 0 : i32
    %c0_i32_0 = arith.constant 0 : i32
    %c0_i32_1 = arith.constant 0 : i32
    return %arg0, %arg1, %c0_i32, %c0_i32_0 : i32, i32, i32, i32
  }
}

</mosaic_0001>

<llo_original>
// kernel: tpu_custom_call.1
$region0: #{tpu_custom_call.1}
  #allocation0 [shape = 'u32[]', space=smem, size = 0x4, offset = 0x4, fixed_abs, tag = 'smem constant byte address 0x4 - core index']
  #allocation1 [shape = 'u32[72,128]{1,0:T(1,128)}', space=vmem, size = 0x9000, scoped, tag = 'internal scratch']
  %s0 = inlined_call_operand.vmem [shape: f32[16,1], index: 0, kind: input, shape index: {}]
  %s1 = inlined_call_operand.vmem [shape: f32[1,128], index: 1, kind: input, shape index: {}]
  %s2 = inlined_call_operand.vmem [shape: f32[1,128], index: 2, kind: input, shape index: {}]
  %s3 = inlined_call_operand.hbm [shape: f32[1,1,1,128], index: 3, kind: output, shape index: {}]
  %s4 = sld [smem:[#allocation0]]
  $region22: #{tpu_custom_call.1} parent=0
    _
  %s6 = ssub.s32 1, %s4
  %s7 = scalar_select 0, %s6, %s4
  $region1: #{tpu_custom_call.1} parent=0
    #allocation2 [shape = 'u8[512]{0}', space=vmem, size = 0x400, scoped, tag = 'output window, operand 0, single buffered']
    #allocation3 [shape = 's32[1]{0}', space=sflag, size = 0x4, scoped, tag = 'scoped memory for tpu_custom_call.1']
    %8 = vsyncpa [#allocation3], 0
    // Predicated region
    $region2: #{tpu_custom_call.1} parent=1 // pred_check
      _
    $region3: #{tpu_custom_call.1} parent=1 // pred_check_branch
      %10 = sbr.rel (0) target = $region5
    $region4: #{tpu_custom_call.1} parent=1 // pred_region
      _
    $region5: #{tpu_custom_call.1} parent=1 // pred_fallthru
      _
    // Predicated region
    $region6: #{tpu_custom_call.1} parent=1 // pred_check
      _
    $region7: #{tpu_custom_call.1} parent=1 // pred_check_branch
      %12 = sbr.rel (0) target = $region9
    $region8: #{tpu_custom_call.1} parent=1 // pred_region
      _
    $region9: #{tpu_custom_call.1} parent=1 // pred_fallthru
      _
    // Predicated region
    $region10: #{tpu_custom_call.1} parent=1 // pred_check
      _
    $region11: #{tpu_custom_call.1} parent=1 // pred_check_branch
      %14 = sbr.rel (0) target = $region13
    $region12: #{tpu_custom_call.1} parent=1 // pred_region
      _
    $region13: #{tpu_custom_call.1} parent=1 // pred_fallthru
      _
    %v15 = vld [vmem:[%s0] sm:$0xff]
    %v16 = vld [vmem:[%s0 + $0x8] sm:$0xff]
    %v17 = vld [vmem:[%s1] sm:$0x1]
    %v18 = vld [vmem:[%s2] sm:$0x1]
    %v19 = vlaneseq
    %v20 = vshrl.u32 %v19, 7
    %v21 = vadd.s32 %v20, 8
    %s22 = smul.u32 0, 16
    %v23 = vstv %s22
    %v24 = vadd.s32 %v20, %v23
    %v25 = vadd.s32 %v21, %v23
    %vm26 = vcmp.lt.s32.totalorder %v24, 16
    %vm27 = vcmp.lt.s32.totalorder %v25, 16
    %v28 = vsel %vm26, 1, 0
    %v29 = vsel %vm27, 1, 0
    %v30 = vcvt.s32.f32 %v28
    %v31 = vcvt.s32.f32 %v29
    %33 = vset.pattern.permute.xlu0 0
    %34 = vperm.xlu0 %33, %v15
    %v35 = vpop.permute.xlu0 %34
    %38 = vset.pattern.permute.xlu0 0
    %39 = vperm.xlu0 %38, %v16
    %v40 = vpop.permute.xlu0 %39
    %v43 = vperm.slane %v18, 0
    %v45 = vmul.f32 %v35, %v43
    %v46 = vmul.f32 %v40, %v43
    %v48 = vperm.slane %v17, 0
    %v50 = vsub.f32 %v48, %v45
    %v51 = vsub.f32 %v48, %v46
    %v52 = vand.u32 2147483647, %v50
    %v53 = vand.u32 2147483647, %v51
    %v54 = vmul.f32 %v30, %v52
    %v55 = vmul.f32 %v31, %v53
    %v56 = vadd.f32 %v54, %v55
    %v57 = vrot.slane %v56, 4
    %v58 = vadd.f32 %v56, %v57
    %v59 = vrot.slane %v58, 2
    %v60 = vadd.f32 %v58, %v59
    %v61 = vrot.slane %v60, 1
    %v62 = vadd.f32 %v60, %v61
    %63 = vst [vmem:[#allocation2] sm:$0x1] %v62
    // Predicated region
    $region14: #{tpu_custom_call.1} parent=1 // pred_check
      _
    $region15: #{tpu_custom_call.1} parent=1 // pred_check_branch
      %65 = sbr.rel (0) target = $region17
    $region16: #{tpu_custom_call.1} parent=1 // pred_region
      %67 = vsyncadd [#allocation3], 0
      %s69 = sshll.u32 [#allocation2], 4
      %s70 = int_to_ptr.vmem [resolvable:$true] %s69
      %s71 = sshll.u32 %s3, 4
      %s72 = int_to_ptr.hbm [resolvable:$true] %s71
      %74 = dma.vmem_to_hbm [thread:$0]  %s70, 16, %s72, [#allocation3]
    $region17: #{tpu_custom_call.1} parent=1 // pred_fallthru
      _
    // Predicated region
    $region18: #{tpu_custom_call.1} parent=1 // pred_check
      _
    $region19: #{tpu_custom_call.1} parent=1 // pred_check_branch
      %76 = sbr.rel (0) target = $region21
    $region20: #{tpu_custom_call.1} parent=1 // pred_region
      %78 = dma.done [#allocation3], 16
    $region21: #{tpu_custom_call.1} parent=1 // pred_fallthru
      _
    %79 = vsyncpa [#allocation3], 1

</llo_original>
